<compile_context>
chip_gen: v7x
topology: tpu7x:2x2x1
jax: 0.10.0
libtpu: 0.0.40
codegen_flags: <defaults>
</compile_context>

<pallas_src>
import jax
import jax.numpy as jnp
from jax.experimental import pallas as pl
from jax.experimental.pallas import tpu as pltpu

DIM_IN = 1000
DIM_OUT = 10
HIDDEN_SIZE = 100

# Lane-dense padded sizes for the small N dims only; K=1000 stays unpadded.
HIDDEN_PAD = 128
DIM_OUT_PAD = 128


def _round_up(n, m):
    return (n + m - 1) // m * m


def _cdiv(a, b):
    return -(-a // b)


def tiny_model_kernel(x_ref, w1_ref, b1_ref, w2_ref, b2_ref, o_ref):
    # x arrives as f32; cast to bf16 for the MXU (VPU work, hidden under DMA).
    x_bf = x_ref[...].astype(jnp.bfloat16)
    # layer1: bf16 MXU matmul over K=1000, f32 accumulate.
    h = jnp.dot(x_bf, w1_ref[...], preferred_element_type=jnp.float32)
    # bias + ReLU in f32 on the VPU (portable to v5e, which has no bf16 VPU).
    h = jnp.maximum(h + b1_ref[...], 0.0)
    # layer2: hidden -> bf16 for the MXU, f32 accumulate, bf16 writeback.
    out = jnp.dot(h.astype(jnp.bfloat16), w2_ref[...],
                  preferred_element_type=jnp.float32)
    o_ref[...] = (out + b2_ref[...]).astype(jnp.bfloat16)


def pad_and_cast_params(w1, b1, w2, b2):
    """Zero-pad params to lane-dense N; matmul weights -> bf16, biases -> f32.

    w1: (DIM_IN, HIDDEN)   b1: (1, HIDDEN)
    w2: (HIDDEN, DIM_OUT)  b2: (1, DIM_OUT)
    Zero padding is exact: padded hidden lanes stay 0 through bias/ReLU and
    padded output lanes stay 0, so slicing back to DIM_OUT is lossless.
    """
    w1p = jnp.zeros((DIM_IN, HIDDEN_PAD), jnp.bfloat16)
    w1p = w1p.at[:, :HIDDEN_SIZE].set(w1.astype(jnp.bfloat16))
    b1p = jnp.zeros((1, HIDDEN_PAD), jnp.float32)
    b1p = b1p.at[:, :HIDDEN_SIZE].set(b1.reshape(1, HIDDEN_SIZE).astype(jnp.float32))
    w2p = jnp.zeros((HIDDEN_PAD, DIM_OUT_PAD), jnp.bfloat16)
    w2p = w2p.at[:HIDDEN_SIZE, :DIM_OUT].set(w2.astype(jnp.bfloat16))
    b2p = jnp.zeros((1, DIM_OUT_PAD), jnp.float32)
    b2p = b2p.at[:, :DIM_OUT].set(b2.reshape(1, DIM_OUT).astype(jnp.float32))
    return w1p, b1p, w2p, b2p


def tiny_model_forward(x, w1p, b1p, w2p, b2p, *, tb=1024):
    """x: (B, DIM_IN) f32. Params already padded/cast via pad_and_cast_params.
    Returns (B, DIM_OUT) f32."""
    B = x.shape[0]

    # Batch tiling: round B up to the f32 sublane (8), then derive TB from B so
    #  - over-padding stays within one sublane group per step (no blow-up to a
    #    full TB multiple for unlucky B), and
    #  - the grid has >= 2 steps whenever B allows, so v7x's two TensorCores
    #    both take "parallel" batch slices (v5e/v6e unaffected).
    B_pad = _round_up(max(B, 8), 8)
    n_steps = _cdiv(B_pad, tb)
    if B_pad >= 16 and n_steps < 2:
        n_steps = 2
    TB = _round_up(_cdiv(B_pad, n_steps), 8)
    B_pad = TB * n_steps
    grid = (n_steps,)

    # Only batch padding, in x's native f32: no wrapper-side feature pad or
    # dtype-conversion pass over x (the bf16 cast happens inside the kernel).
    if B_pad != B:
        x = jnp.pad(x, ((0, B_pad - B), (0, 0)))

    flops = 2 * B_pad * (DIM_IN * HIDDEN_PAD + HIDDEN_PAD * DIM_OUT_PAD)
    bytes_accessed = (
        B_pad * DIM_IN * 4                      # f32 input, read once in-kernel
        + w1p.size * 2 + w2p.size * 2           # bf16 weights (resident)
        + b1p.size * 4 + b2p.size * 4           # f32 biases
        + B_pad * DIM_OUT_PAD * 2               # bf16 output
    )
    cost = pl.CostEstimate(flops=flops, transcendentals=0,
                           bytes_accessed=bytes_accessed)

    # Size the VMEM request to the real footprint plus headroom; never ask for
    # all of v7x's 64 MiB physical VMEM.
    vmem_bytes = (
        2 * TB * DIM_IN * 4              # x tile, f32, double-buffered
        + 2 * TB * DIM_OUT_PAD * 2       # out tile, bf16, double-buffered
        + DIM_IN * HIDDEN_PAD * 2        # W1 (resident)
        + HIDDEN_PAD * DIM_OUT_PAD * 2   # W2 (resident)
        + TB * DIM_IN * 2                # in-kernel bf16 cast of x
        + TB * HIDDEN_PAD * (4 + 2)      # f32 hidden + bf16 hidden
        + (4 << 20)                      # compiler scratch headroom
    )
    vmem_limit = int(min(_round_up(vmem_bytes, 1 << 20), 48 << 20))

    out = pl.pallas_call(
        tiny_model_kernel,
        out_shape=jax.ShapeDtypeStruct((B_pad, DIM_OUT_PAD), jnp.bfloat16),
        grid=grid,
        in_specs=[
            # x tile marches with the batch grid index; last dim (1000) equals
            # the full array dim, so the (8,128) rule is satisfied.
            pl.BlockSpec((TB, DIM_IN), lambda i: (i, 0)),
            # Weights/biases: constant block index -> resident, DMA'd once.
            pl.BlockSpec((DIM_IN, HIDDEN_PAD), lambda i: (0, 0)),
            pl.BlockSpec((1, HIDDEN_PAD), lambda i: (0, 0)),
            pl.BlockSpec((HIDDEN_PAD, DIM_OUT_PAD), lambda i: (0, 0)),
            pl.BlockSpec((1, DIM_OUT_PAD), lambda i: (0, 0)),
        ],
        out_specs=pl.BlockSpec((TB, DIM_OUT_PAD), lambda i: (i, 0)),
        compiler_params=pltpu.CompilerParams(
            dimension_semantics=("parallel",),  # batch splits across v7x's 2 TCs
            vmem_limit_bytes=vmem_limit,
        ),
        cost_estimate=cost,
    )(x, w1p, b1p, w2p, b2p)

    # Strip batch / output-lane padding; return f32 to callers.
    return out[:B, :DIM_OUT].astype(jnp.float32)


def init_params(key):
    # Deterministic init mimicking torch.nn.Linear default:
    # U(-1/sqrt(fan_in), +1/sqrt(fan_in)). Weights stored pre-transposed (in, out).
    k1, k2, k3, k4 = jax.random.split(key, 4)
    bound1 = 1.0 / (DIM_IN ** 0.5)
    bound2 = 1.0 / (HIDDEN_SIZE ** 0.5)
    w1 = jax.random.uniform(k1, (DIM_IN, HIDDEN_SIZE), jnp.float32, -bound1, bound1)
    b1 = jax.random.uniform(k2, (1, HIDDEN_SIZE), jnp.float32, -bound1, bound1)
    w2 = jax.random.uniform(k3, (HIDDEN_SIZE, DIM_OUT), jnp.float32, -bound2, bound2)
    b2 = jax.random.uniform(k4, (1, DIM_OUT), jnp.float32, -bound2, bound2)
    return w1, b1, w2, b2


if __name__ == "__main__":
    key = jax.random.PRNGKey(0)
    pkey, xkey = jax.random.split(key)
    w1, b1, w2, b2 = init_params(pkey)
    w1p, b1p, w2p, b2p = pad_and_cast_params(w1, b1, w2, b2)

    B = 2
    x = jax.random.normal(xkey, (B, DIM_IN), jnp.float32)

    out = tiny_model_forward(x, w1p, b1p, w2p, b2p)
    out = jax.block_until_ready(out)

    # Reference in plain f32 JAX (same math as the PyTorch forward).
    ref = jnp.maximum(x @ w1 + b1, 0.0) @ w2 + b2
    assert out.shape == (B, DIM_OUT)
    # bf16 matmul inputs / bf16 writeback with f32 accumulation -> loosened tol.
    assert jnp.allclose(out, ref, atol=2e-2, rtol=2e-2), (
        float(jnp.max(jnp.abs(out - ref))))

    print("KERNEL_OK")
</pallas_src>

<mosaic_0001>
module attributes {stable_mosaic.version = 11 : i64} {
  func.func @tiny_model_kernel(%arg0: i32, %arg1: memref<8x1000xf32, #tpu.memory_space<vmem>>, %arg2: memref<1000x128xbf16, #tpu.memory_space<vmem>>, %arg3: memref<1x128xf32, #tpu.memory_space<vmem>>, %arg4: memref<128x128xbf16, #tpu.memory_space<vmem>>, %arg5: memref<1x128xf32, #tpu.memory_space<vmem>>, %arg6: memref<8x128xbf16, #tpu.memory_space<vmem>>) attributes {dimension_semantics = [#tpu.dimension_semantics<parallel>], iteration_bounds = array<i64: 1>, scalar_prefetch = 0 : i64, scratch_operands = 0 : i64, tpu.core_type = #tpu.core_type<tc>, window_params = [{transform_indices = @transform_0, window_bounds = array<i64: 8, 1000>}, {pipeline_mode = #tpu.pipeline_mode<synchronous>, transform_indices = @transform_1, window_bounds = array<i64: 1000, 128>}, {pipeline_mode = #tpu.pipeline_mode<synchronous>, transform_indices = @transform_2, window_bounds = array<i64: 1, 128>}, {pipeline_mode = #tpu.pipeline_mode<synchronous>, transform_indices = @transform_3, window_bounds = array<i64: 128, 128>}, {pipeline_mode = #tpu.pipeline_mode<synchronous>, transform_indices = @transform_4, window_bounds = array<i64: 1, 128>}, {transform_indices = @transform_5, window_bounds = array<i64: 8, 128>}]} {
    %c0 = arith.constant 0 : index
    %c0_0 = arith.constant 0 : index
    %0 = vector.load %arg1[%c0, %c0_0] : memref<8x1000xf32, #tpu.memory_space<vmem>>, vector<8x1000xf32>
    %1 = arith.truncf %0 : vector<8x1000xf32> to vector<8x1000xbf16>
    %c0_1 = arith.constant 0 : index
    %c0_2 = arith.constant 0 : index
    %2 = vector.load %arg2[%c0_1, %c0_2] : memref<1000x128xbf16, #tpu.memory_space<vmem>>, vector<1000x128xbf16>
    %cst = arith.constant dense<0.000000e+00> : vector<8x128xf32>
    %3 = tpu.matmul %1, %2, %cst {dimension_numbers = #tpu.dot_dimension_numbers<[1], [0], [0], [1], [0, 0, 1, 1], [], []>} : vector<8x1000xbf16>, vector<1000x128xbf16>, vector<8x128xf32> -> vector<8x128xf32>
    %c0_3 = arith.constant 0 : index
    %c0_4 = arith.constant 0 : index
    %4 = vector.load %arg3[%c0_3, %c0_4] : memref<1x128xf32, #tpu.memory_space<vmem>>, vector<1x128xf32>
    %5 = vector.broadcast %4 : vector<1x128xf32> to vector<8x128xf32>
    %6 = arith.addf %3, %5 : vector<8x128xf32>
    %cst_5 = arith.constant 0.000000e+00 : f32
    %7 = vector.broadcast %cst_5 : f32 to vector<8x128xf32>
    %8 = arith.maximumf %6, %7 : vector<8x128xf32>
    %9 = arith.truncf %8 : vector<8x128xf32> to vector<8x128xbf16>
    %c0_6 = arith.constant 0 : index
    %c0_7 = arith.constant 0 : index
    %10 = vector.load %arg4[%c0_6, %c0_7] : memref<128x128xbf16, #tpu.memory_space<vmem>>, vector<128x128xbf16>
    %cst_8 = arith.constant dense<0.000000e+00> : vector<8x128xf32>
    %11 = tpu.matmul %9, %10, %cst_8 {dimension_numbers = #tpu.dot_dimension_numbers<[1], [0], [0], [1], [0, 0, 1, 1], [], []>} : vector<8x128xbf16>, vector<128x128xbf16>, vector<8x128xf32> -> vector<8x128xf32>
    %c0_9 = arith.constant 0 : index
    %c0_10 = arith.constant 0 : index
    %12 = vector.load %arg5[%c0_9, %c0_10] : memref<1x128xf32, #tpu.memory_space<vmem>>, vector<1x128xf32>
    %13 = vector.broadcast %12 : vector<1x128xf32> to vector<8x128xf32>
    %14 = arith.addf %11, %13 : vector<8x128xf32>
    %15 = arith.truncf %14 : vector<8x128xf32> to vector<8x128xbf16>
    %c0_11 = arith.constant 0 : index
    %c0_12 = arith.constant 0 : index
    %16 = vector.load %arg6[%c0_11, %c0_12] : memref<8x128xbf16, #tpu.memory_space<vmem>>, vector<8x128xbf16>
    tpu.vector_store %arg6[%c0_11, %c0_12], %15 {strides = array<i32>} : memref<8x128xbf16, #tpu.memory_space<vmem>>, vector<8x128xbf16>,
    return
  }
  func.func @transform_0(%arg0: i32) -> (i32, i32) {
    %c0_i32 = arith.constant 0 : i32
    %c0_i32_0 = arith.constant 0 : i32
    return %arg0, %c0_i32 : i32, i32
  }
  func.func @transform_1(%arg0: i32) -> (i32, i32) {
    %c0_i32 = arith.constant 0 : i32
    %c0_i32_0 = arith.constant 0 : i32
    %c0_i32_1 = arith.constant 0 : i32
    return %c0_i32, %c0_i32_0 : i32, i32
  }
  func.func @transform_2(%arg0: i32) -> (i32, i32) {
    %c0_i32 = arith.constant 0 : i32
    %c0_i32_0 = arith.constant 0 : i32
    %c0_i32_1 = arith.constant 0 : i32
    return %c0_i32, %c0_i32_0 : i32, i32
  }
  func.func @transform_3(%arg0: i32) -> (i32, i32) {
    %c0_i32 = arith.constant 0 : i32
    %c0_i32_0 = arith.constant 0 : i32
    %c0_i32_1 = arith.constant 0 : i32
    return %c0_i32, %c0_i32_0 : i32, i32
  }
  func.func @transform_4(%arg0: i32) -> (i32, i32) {
    %c0_i32 = arith.constant 0 : i32
    %c0_i32_0 = arith.constant 0 : i32
    %c0_i32_1 = arith.constant 0 : i32
    return %c0_i32, %c0_i32_0 : i32, i32
  }
  func.func @transform_5(%arg0: i32) -> (i32, i32) {
    %c0_i32 = arith.constant 0 : i32
    %c0_i32_0 = arith.constant 0 : i32
    return %arg0, %c0_i32 : i32, i32
  }
}

</mosaic_0001>

<llo_original>
// kernel: tpu_custom_call.1
$region0: #{tpu_custom_call.1}
  #allocation0 [shape = 'u32[]', space=smem, size = 0x4, offset = 0x4, fixed_abs, tag = 'smem constant byte address 0x4 - core index']
  #allocation1 [shape = 'u32[144,128]{1,0:T(1,128)}', space=vmem, size = 0x12000, scoped, tag = 'internal scratch']
  %s0 = inlined_call_operand.hbm [shape: f32[8,1000], index: 0, kind: input, shape index: {}]
  %s1 = inlined_call_operand.hbm [shape: bf16[1000,128], index: 1, kind: input, shape index: {}]
  %s2 = inlined_call_operand.vmem [shape: f32[1,128], index: 2, kind: input, shape index: {}]
  %s3 = inlined_call_operand.hbm [shape: bf16[128,128], index: 3, kind: input, shape index: {}]
  %s4 = inlined_call_operand.vmem [shape: f32[1,128], index: 4, kind: input, shape index: {}]
  %s5 = inlined_call_operand.hbm [shape: bf16[8,128], index: 5, kind: output, shape index: {}]
  %s6 = sld [smem:[#allocation0]]
  $region42: #{tpu_custom_call.1} parent=0
    _
  %s8 = ssub.s32 1, %s6
  %s9 = scalar_select 0, %s8, %s6
  $region1: #{tpu_custom_call.1} parent=0
    #allocation2 [shape = 'u8[32768]{0}', space=vmem, size = 0x8000, scoped, tag = 'input window, operand 0, single buffered']
    #allocation3 [shape = 's32[1]{0}', space=sflag, size = 0x4, scoped, tag = 'scoped memory for tpu_custom_call.1']
    #allocation4 [shape = 's32[1]{0}', space=sflag, size = 0x4, scoped, tag = 'scoped memory for tpu_custom_call.1']
    #allocation5 [shape = 'u8[256000]{0}', space=vmem, size = 0x3e800, scoped, tag = 'input window, operand 1, single buffered']
    #allocation6 [shape = 's32[1]{0}', space=sflag, size = 0x4, scoped, tag = 'scoped memory for tpu_custom_call.1']
    #allocation7 [shape = 'u8[32768]{0}', space=vmem, size = 0x8000, scoped, tag = 'input window, operand 3, single buffered']
    #allocation8 [shape = 'u8[2048]{0}', space=vmem, size = 0x800, scoped, tag = 'output window, operand 0, single buffered']
    %10 = vsyncpa [#allocation3], 0
    %11 = vsyncpa [#allocation6], 0
    %12 = vsyncpa [#allocation4], 0
    // Predicated region
    $region2: #{tpu_custom_call.1} parent=1 // pred_check
      _
    $region3: #{tpu_custom_call.1} parent=1 // pred_check_branch
      %14 = sbr.rel (0) target = $region5
    $region4: #{tpu_custom_call.1} parent=1 // pred_region
      %s16 = ssub.s32 1024, 1024
      %17 = vsyncadd [#allocation3], %s16
      %s19 = sshll.u32 [#allocation2], 4
      %s20 = int_to_ptr.vmem [resolvable:$true] %s19
      %22 = dma.hbm_to_vmem [thread:$0]  %s0, 1024, %s20, [#allocation3]
    $region5: #{tpu_custom_call.1} parent=1 // pred_fallthru
      _
    // Predicated region
    $region6: #{tpu_custom_call.1} parent=1 // pred_check
      _
    $region7: #{tpu_custom_call.1} parent=1 // pred_check_branch
      %24 = sbr.rel (0) target = $region9
    $region8: #{tpu_custom_call.1} parent=1 // pred_region
      %s26 = ssub.s32 8000, 8000
      %27 = vsyncadd [#allocation6], %s26
      %s28 = sshll.u32 [#allocation5], 4
      %s29 = int_to_ptr.vmem [resolvable:$true] %s28
      %34 = dma.hbm_to_vmem [thread:$0]  %s1, 8000, %s29, [#allocation6], 64, 64, 4
    $region9: #{tpu_custom_call.1} parent=1 // pred_fallthru
      _
    // Predicated region
    $region10: #{tpu_custom_call.1} parent=1 // pred_check
      _
    $region11: #{tpu_custom_call.1} parent=1 // pred_check_branch
      %36 = sbr.rel (0) target = $region13
    $region12: #{tpu_custom_call.1} parent=1 // pred_region
      _
    $region13: #{tpu_custom_call.1} parent=1 // pred_fallthru
      _
    // Predicated region
    $region14: #{tpu_custom_call.1} parent=1 // pred_check
      _
    $region15: #{tpu_custom_call.1} parent=1 // pred_check_branch
      %38 = sbr.rel (0) target = $region17
    $region16: #{tpu_custom_call.1} parent=1 // pred_region
      %s40 = ssub.s32 1024, 1024
      %41 = vsyncadd [#allocation6], %s40
      %s42 = sshll.u32 [#allocation7], 4
      %s43 = int_to_ptr.vmem [resolvable:$true] %s42
      %48 = dma.hbm_to_vmem [thread:$0]  %s3, 1024, %s43, [#allocation6], 64, 64, 4
    $region17: #{tpu_custom_call.1} parent=1 // pred_fallthru
      _
    // Predicated region
    $region18: #{tpu_custom_call.1} parent=1 // pred_check
      _
    $region19: #{tpu_custom_call.1} parent=1 // pred_check_branch
      %50 = sbr.rel (0) target = $region21
    $region20: #{tpu_custom_call.1} parent=1 // pred_region
      _
    $region21: #{tpu_custom_call.1} parent=1 // pred_fallthru
      _
    // Predicated region
    $region22: #{tpu_custom_call.1} parent=1 // pred_check
      _
    $region23: #{tpu_custom_call.1} parent=1 // pred_check_branch
      %52 = sbr.rel (0) target = $region25
    $region24: #{tpu_custom_call.1} parent=1 // pred_region
      %53 = dma.done [#allocation3], 1024
    $region25: #{tpu_custom_call.1} parent=1 // pred_fallthru
      _
    // Predicated region
    $region26: #{tpu_custom_call.1} parent=1 // pred_check
      _
    $region27: #{tpu_custom_call.1} parent=1 // pred_check_branch
      %55 = sbr.rel (0) target = $region29
    $region28: #{tpu_custom_call.1} parent=1 // pred_region
      %56 = dma.done [#allocation6], 8000
    $region29: #{tpu_custom_call.1} parent=1 // pred_fallthru
      _
    // Predicated region
    $region30: #{tpu_custom_call.1} parent=1 // pred_check
      _
    $region31: #{tpu_custom_call.1} parent=1 // pred_check_branch
      %58 = sbr.rel (0) target = $region33
    $region32: #{tpu_custom_call.1} parent=1 // pred_region
      %59 = dma.done [#allocation6], 1024
    $region33: #{tpu_custom_call.1} parent=1 // pred_fallthru
      _
    %v61 = vld [vmem:[#allocation2] sm:$0xff]
    %v62 = vld [vmem:[#allocation2 + $0x8] sm:$0xff]
    %v63 = vld [vmem:[#allocation2 + $0x10] sm:$0xff]
    %v64 = vld [vmem:[#allocation2 + $0x18] sm:$0xff]
    %v65 = vld [vmem:[#allocation2 + $0x20] sm:$0xff]
    %v66 = vld [vmem:[#allocation2 + $0x28] sm:$0xff]
    %v67 = vld [vmem:[#allocation2 + $0x30] sm:$0xff]
    %v68 = vld [vmem:[#allocation2 + $0x38] sm:$0xff]
    %v69 = vpack.c.bf16 %v61, %v61
    %v70 = vpack.c.bf16 %v62, %v62
    %v71 = vpack.c.bf16 %v63, %v63
    %v72 = vpack.c.bf16 %v64, %v64
    %v73 = vpack.c.bf16 %v65, %v65
    %v74 = vpack.c.bf16 %v66, %v66
    %v75 = vpack.c.bf16 %v67, %v67
    %v76 = vpack.c.bf16 %v68, %v68
    %v77 = vld [vmem:[#allocation5] sm:$0xf]
    %v78 = vld [vmem:[#allocation5 + $0x4] sm:$0xf]
    %v79 = vld [vmem:[#allocation5 + $0x8] sm:$0xf]
    %v80 = vld [vmem:[#allocation5 + $0xc] sm:$0xf]
    %v81 = vld [vmem:[#allocation5 + $0x10] sm:$0xf]
    %v82 = vld [vmem:[#allocation5 + $0x14] sm:$0xf]
    %v83 = vld [vmem:[#allocation5 + $0x18] sm:$0xf]
    %v84 = vld [vmem:[#allocation5 + $0x1c] sm:$0xf]
    %v85 = vld [vmem:[#allocation5 + $0x20] sm:$0xf]
    %v86 = vld [vmem:[#allocation5 + $0x24] sm:$0xf]
    %v87 = vld [vmem:[#allocation5 + $0x28] sm:$0xf]
    %v88 = vld [vmem:[#allocation5 + $0x2c] sm:$0xf]
    %v89 = vld [vmem:[#allocation5 + $0x30] sm:$0xf]
    %v90 = vld [vmem:[#allocation5 + $0x34] sm:$0xf]
    %v91 = vld [vmem:[#allocation5 + $0x38] sm:$0xf]
    %v92 = vld [vmem:[#allocation5 + $0x3c] sm:$0xf]
    %v93 = vld [vmem:[#allocation5 + $0x40] sm:$0xf]
    %v94 = vld [vmem:[#allocation5 + $0x44] sm:$0xf]
    %v95 = vld [vmem:[#allocation5 + $0x48] sm:$0xf]
    %v96 = vld [vmem:[#allocation5 + $0x4c] sm:$0xf]
    %v97 = vld [vmem:[#allocation5 + $0x50] sm:$0xf]
    %v98 = vld [vmem:[#allocation5 + $0x54] sm:$0xf]
    %v99 = vld [vmem:[#allocation5 + $0x58] sm:$0xf]
    %v100 = vld [vmem:[#allocation5 + $0x5c] sm:$0xf]
    %v101 = vld [vmem:[#allocation5 + $0x60] sm:$0xf]
    %v102 = vld [vmem:[#allocation5 + $0x64] sm:$0xf]
    %v103 = vld [vmem:[#allocation5 + $0x68] sm:$0xf]
    %v104 = vld [vmem:[#allocation5 + $0x6c] sm:$0xf]
    %v105 = vld [vmem:[#allocation5 + $0x70] sm:$0xf]
    %v106 = vld [vmem:[#allocation5 + $0x74] sm:$0xf]
    %v107 = vld [vmem:[#allocation5 + $0x78] sm:$0xf]
    %v108 = vld [vmem:[#allocation5 + $0x7c] sm:$0xf]
    %v109 = vld [vmem:[#allocation5 + $0x80] sm:$0xf]
    %v110 = vld [vmem:[#allocation5 + $0x84] sm:$0xf]
    %v111 = vld [vmem:[#allocation5 + $0x88] sm:$0xf]
    %v112 = vld [vmem:[#allocation5 + $0x8c] sm:$0xf]
    %v113 = vld [vmem:[#allocation5 + $0x90] sm:$0xf]
    %v114 = vld [vmem:[#allocation5 + $0x94] sm:$0xf]
    %v115 = vld [vmem:[#allocation5 + $0x98] sm:$0xf]
    %v116 = vld [vmem:[#allocation5 + $0x9c] sm:$0xf]
    %v117 = vld [vmem:[#allocation5 + $0xa0] sm:$0xf]
    %v118 = vld [vmem:[#allocation5 + $0xa4] sm:$0xf]
    %v119 = vld [vmem:[#allocation5 + $0xa8] sm:$0xf]
    %v120 = vld [vmem:[#allocation5 + $0xac] sm:$0xf]
    %v121 = vld [vmem:[#allocation5 + $0xb0] sm:$0xf]
    %v122 = vld [vmem:[#allocation5 + $0xb4] sm:$0xf]
    %v123 = vld [vmem:[#allocation5 + $0xb8] sm:$0xf]
    %v124 = vld [vmem:[#allocation5 + $0xbc] sm:$0xf]
    %v125 = vld [vmem:[#allocation5 + $0xc0] sm:$0xf]
    %v126 = vld [vmem:[#allocation5 + $0xc4] sm:$0xf]
    %v127 = vld [vmem:[#allocation5 + $0xc8] sm:$0xf]
    %v128 = vld [vmem:[#allocation5 + $0xcc] sm:$0xf]
    %v129 = vld [vmem:[#allocation5 + $0xd0] sm:$0xf]
    %v130 = vld [vmem:[#allocation5 + $0xd4] sm:$0xf]
    %v131 = vld [vmem:[#allocation5 + $0xd8] sm:$0xf]
    %v132 = vld [vmem:[#allocation5 + $0xdc] sm:$0xf]
    %v133 = vld [vmem:[#allocation5 + $0xe0] sm:$0xf]
    %v134 = vld [vmem:[#allocation5 + $0xe4] sm:$0xf]
    %v135 = vld [vmem:[#allocation5 + $0xe8] sm:$0xf]
    %v136 = vld [vmem:[#allocation5 + $0xec] sm:$0xf]
    %v137 = vld [vmem:[#allocation5 + $0xf0] sm:$0xf]
    %v138 = vld [vmem:[#allocation5 + $0xf4] sm:$0xf]
    %v139 = vld [vmem:[#allocation5 + $0xf8] sm:$0xf]
    %v140 = vld [vmem:[#allocation5 + $0xfc] sm:$0xf]
    %v141 = vld [vmem:[#allocation5 + $0x100] sm:$0xf]
    %v142 = vld [vmem:[#allocation5 + $0x104] sm:$0xf]
    %v143 = vld [vmem:[#allocation5 + $0x108] sm:$0xf]
    %v144 = vld [vmem:[#allocation5 + $0x10c] sm:$0xf]
    %v145 = vld [vmem:[#allocation5 + $0x110] sm:$0xf]
    %v146 = vld [vmem:[#allocation5 + $0x114] sm:$0xf]
    %v147 = vld [vmem:[#allocation5 + $0x118] sm:$0xf]
    %v148 = vld [vmem:[#allocation5 + $0x11c] sm:$0xf]
    %v149 = vld [vmem:[#allocation5 + $0x120] sm:$0xf]
    %v150 = vld [vmem:[#allocation5 + $0x124] sm:$0xf]
    %v151 = vld [vmem:[#allocation5 + $0x128] sm:$0xf]
    %v152 = vld [vmem:[#allocation5 + $0x12c] sm:$0xf]
    %v153 = vld [vmem:[#allocation5 + $0x130] sm:$0xf]
    %v154 = vld [vmem:[#allocation5 + $0x134] sm:$0xf]
    %v155 = vld [vmem:[#allocation5 + $0x138] sm:$0xf]
    %v156 = vld [vmem:[#allocation5 + $0x13c] sm:$0xf]
    %v157 = vld [vmem:[#allocation5 + $0x140] sm:$0xf]
    %v158 = vld [vmem:[#allocation5 + $0x144] sm:$0xf]
    %v159 = vld [vmem:[#allocation5 + $0x148] sm:$0xf]
    %v160 = vld [vmem:[#allocation5 + $0x14c] sm:$0xf]
    %v161 = vld [vmem:[#allocation5 + $0x150] sm:$0xf]
    %v162 = vld [vmem:[#allocation5 + $0x154] sm:$0xf]
    %v163 = vld [vmem:[#allocation5 + $0x158] sm:$0xf]
    %v164 = vld [vmem:[#allocation5 + $0x15c] sm:$0xf]
    %v165 = vld [vmem:[#allocation5 + $0x160] sm:$0xf]
    %v166 = vld [vmem:[#allocation5 + $0x164] sm:$0xf]
    %v167 = vld [vmem:[#allocation5 + $0x168] sm:$0xf]
    %v168 = vld [vmem:[#allocation5 + $0x16c] sm:$0xf]
    %v169 = vld [vmem:[#allocation5 + $0x170] sm:$0xf]
    %v170 = vld [vmem:[#allocation5 + $0x174] sm:$0xf]
    %v171 = vld [vmem:[#allocation5 + $0x178] sm:$0xf]
    %v172 = vld [vmem:[#allocation5 + $0x17c] sm:$0xf]
    %v173 = vld [vmem:[#allocation5 + $0x180] sm:$0xf]
    %v174 = vld [vmem:[#allocation5 + $0x184] sm:$0xf]
    %v175 = vld [vmem:[#allocation5 + $0x188] sm:$0xf]
    %v176 = vld [vmem:[#allocation5 + $0x18c] sm:$0xf]
    %v177 = vld [vmem:[#allocation5 + $0x190] sm:$0xf]
    %v178 = vld [vmem:[#allocation5 + $0x194] sm:$0xf]
    %v179 = vld [vmem:[#allocation5 + $0x198] sm:$0xf]
    %v180 = vld [vmem:[#allocation5 + $0x19c] sm:$0xf]
    %v181 = vld [vmem:[#allocation5 + $0x1a0] sm:$0xf]
    %v182 = vld [vmem:[#allocation5 + $0x1a4] sm:$0xf]
    %v183 = vld [vmem:[#allocation5 + $0x1a8] sm:$0xf]
    %v184 = vld [vmem:[#allocation5 + $0x1ac] sm:$0xf]
    %v185 = vld [vmem:[#allocation5 + $0x1b0] sm:$0xf]
    %v186 = vld [vmem:[#allocation5 + $0x1b4] sm:$0xf]
    %v187 = vld [vmem:[#allocation5 + $0x1b8] sm:$0xf]
    %v188 = vld [vmem:[#allocation5 + $0x1bc] sm:$0xf]
    %v189 = vld [vmem:[#allocation5 + $0x1c0] sm:$0xf]
    %v190 = vld [vmem:[#allocation5 + $0x1c4] sm:$0xf]
    %v191 = vld [vmem:[#allocation5 + $0x1c8] sm:$0xf]
    %v192 = vld [vmem:[#allocation5 + $0x1cc] sm:$0xf]
    %v193 = vld [vmem:[#allocation5 + $0x1d0] sm:$0xf]
    %v194 = vld [vmem:[#allocation5 + $0x1d4] sm:$0xf]
    %v195 = vld [vmem:[#allocation5 + $0x1d8] sm:$0xf]
    %v196 = vld [vmem:[#allocation5 + $0x1dc] sm:$0xf]
    %v197 = vld [vmem:[#allocation5 + $0x1e0] sm:$0xf]
    %v198 = vld [vmem:[#allocation5 + $0x1e4] sm:$0xf]
    %v199 = vld [vmem:[#allocation5 + $0x1e8] sm:$0xf]
    %v200 = vld [vmem:[#allocation5 + $0x1ec] sm:$0xf]
    %v201 = vld [vmem:[#allocation5 + $0x1f0] sm:$0xf]
    %v202 = vld [vmem:[%s2] sm:$0x1]
    %v204 = vlaneseq
    %v205 = vshrl.u32 %v204, 7
    %v206 = vsub.s32 0, %v205
    %v207 = vrot.slane %v202, %v206
    %v334 = vunpack.c.l.b16 %v77
    %v335 = vunpack.c.l.b16 %v78
    %v336 = vunpack.c.l.b16 %v79
    %v337 = vunpack.c.l.b16 %v80
    %v338 = vunpack.c.l.b16 %v81
    %v339 = vunpack.c.l.b16 %v82
    %v340 = vunpack.c.l.b16 %v83
    %v341 = vunpack.c.l.b16 %v84
    %v342 = vunpack.c.l.b16 %v85
    %v343 = vunpack.c.l.b16 %v86
    %v344 = vunpack.c.l.b16 %v87
    %v345 = vunpack.c.l.b16 %v88
    %v346 = vunpack.c.l.b16 %v89
    %v347 = vunpack.c.l.b16 %v90
    %v348 = vunpack.c.l.b16 %v91
    %v349 = vunpack.c.l.b16 %v92
    %v350 = vunpack.c.l.b16 %v93
    %v351 = vunpack.c.l.b16 %v94
    %v352 = vunpack.c.l.b16 %v95
    %v353 = vunpack.c.l.b16 %v96
    %v354 = vunpack.c.l.b16 %v97
    %v355 = vunpack.c.l.b16 %v98
    %v356 = vunpack.c.l.b16 %v99
    %v357 = vunpack.c.l.b16 %v100
    %v358 = vunpack.c.l.b16 %v101
    %v359 = vunpack.c.l.b16 %v102
    %v360 = vunpack.c.l.b16 %v103
    %v361 = vunpack.c.l.b16 %v104
    %v362 = vunpack.c.l.b16 %v105
    %v363 = vunpack.c.l.b16 %v106
    %v364 = vunpack.c.l.b16 %v107
    %v365 = vunpack.c.l.b16 %v108
    %v366 = vunpack.c.l.b16 %v109
    %v367 = vunpack.c.l.b16 %v110
    %v368 = vunpack.c.l.b16 %v111
    %v369 = vunpack.c.l.b16 %v112
    %v370 = vunpack.c.l.b16 %v113
    %v371 = vunpack.c.l.b16 %v114
    %v372 = vunpack.c.l.b16 %v115
    %v373 = vunpack.c.l.b16 %v116
    %v374 = vunpack.c.l.b16 %v117
    %v375 = vunpack.c.l.b16 %v118
    %v376 = vunpack.c.l.b16 %v119
    %v377 = vunpack.c.l.b16 %v120
    %v378 = vunpack.c.l.b16 %v121
    %v379 = vunpack.c.l.b16 %v122
    %v380 = vunpack.c.l.b16 %v123
    %v381 = vunpack.c.l.b16 %v124
    %v382 = vunpack.c.l.b16 %v125
    %v383 = vunpack.c.l.b16 %v126
    %v384 = vunpack.c.l.b16 %v127
    %v385 = vunpack.c.l.b16 %v128
    %v386 = vunpack.c.l.b16 %v129
    %v387 = vunpack.c.l.b16 %v130
    %v388 = vunpack.c.l.b16 %v131
    %v389 = vunpack.c.l.b16 %v132
    %v390 = vunpack.c.l.b16 %v133
    %v391 = vunpack.c.l.b16 %v134
    %v392 = vunpack.c.l.b16 %v135
    %v393 = vunpack.c.l.b16 %v136
    %v394 = vunpack.c.l.b16 %v137
    %v395 = vunpack.c.l.b16 %v138
    %v396 = vunpack.c.l.b16 %v139
    %v397 = vunpack.c.l.b16 %v140
    %v398 = vunpack.c.l.b16 %v141
    %v399 = vunpack.c.l.b16 %v142
    %v400 = vunpack.c.l.b16 %v143
    %v401 = vunpack.c.l.b16 %v144
    %v402 = vunpack.c.l.b16 %v145
    %v403 = vunpack.c.l.b16 %v146
    %v404 = vunpack.c.l.b16 %v147
    %v405 = vunpack.c.l.b16 %v148
    %v406 = vunpack.c.l.b16 %v149
    %v407 = vunpack.c.l.b16 %v150
    %v408 = vunpack.c.l.b16 %v151
    %v409 = vunpack.c.l.b16 %v152
    %v410 = vunpack.c.l.b16 %v153
    %v411 = vunpack.c.l.b16 %v154
    %v412 = vunpack.c.l.b16 %v155
    %v413 = vunpack.c.l.b16 %v156
    %v414 = vunpack.c.l.b16 %v157
    %v415 = vunpack.c.l.b16 %v158
    %v416 = vunpack.c.l.b16 %v159
    %v417 = vunpack.c.l.b16 %v160
    %v418 = vunpack.c.l.b16 %v161
    %v419 = vunpack.c.l.b16 %v162
    %v420 = vunpack.c.l.b16 %v163
    %v421 = vunpack.c.l.b16 %v164
    %v422 = vunpack.c.l.b16 %v165
    %v423 = vunpack.c.l.b16 %v166
    %v424 = vunpack.c.l.b16 %v167
    %v425 = vunpack.c.l.b16 %v168
    %v426 = vunpack.c.l.b16 %v169
    %v427 = vunpack.c.l.b16 %v170
    %v428 = vunpack.c.l.b16 %v171
    %v429 = vunpack.c.l.b16 %v172
    %v430 = vunpack.c.l.b16 %v173
    %v431 = vunpack.c.l.b16 %v174
    %v432 = vunpack.c.l.b16 %v175
    %v433 = vunpack.c.l.b16 %v176
    %v434 = vunpack.c.l.b16 %v177
    %v435 = vunpack.c.l.b16 %v178
    %v436 = vunpack.c.l.b16 %v179
    %v437 = vunpack.c.l.b16 %v180
    %v438 = vunpack.c.l.b16 %v181
    %v439 = vunpack.c.l.b16 %v182
    %v440 = vunpack.c.l.b16 %v183
    %v441 = vunpack.c.l.b16 %v184
    %v442 = vunpack.c.l.b16 %v185
    %v443 = vunpack.c.l.b16 %v186
    %v444 = vunpack.c.l.b16 %v187
    %v445 = vunpack.c.l.b16 %v188
    %v446 = vunpack.c.l.b16 %v189
    %v447 = vunpack.c.l.b16 %v190
    %v448 = vunpack.c.l.b16 %v191
    %v449 = vunpack.c.l.b16 %v192
    %v450 = vunpack.c.l.b16 %v193
    %v451 = vunpack.c.l.b16 %v194
    %v452 = vunpack.c.l.b16 %v195
    %v453 = vunpack.c.l.b16 %v196
    %v454 = vunpack.c.l.b16 %v197
    %v455 = vunpack.c.l.b16 %v198
    %v456 = vunpack.c.l.b16 %v199
    %v457 = vunpack.c.l.b16 %v200
    %v458 = vunpack.c.l.b16 %v201
    %v459 = vpack.c.b16 %v335, %v334
    %v460 = vpack.c.b16 %v337, %v336
    %v461 = vpack.c.b16 %v339, %v338
    %v462 = vpack.c.b16 %v341, %v340
    %v463 = vpack.c.b16 %v343, %v342
    %v464 = vpack.c.b16 %v345, %v344
    %v465 = vpack.c.b16 %v347, %v346
    %v466 = vpack.c.b16 %v349, %v348
    %v467 = vpack.c.b16 %v351, %v350
    %v468 = vpack.c.b16 %v353, %v352
    %v469 = vpack.c.b16 %v355, %v354
    %v470 = vpack.c.b16 %v357, %v356
    %v471 = vpack.c.b16 %v359, %v358
    %v472 = vpack.c.b16 %v361, %v360
    %v473 = vpack.c.b16 %v363, %v362
    %v474 = vpack.c.b16 %v365, %v364
    %v475 = vpack.c.b16 %v367, %v366
    %v476 = vpack.c.b16 %v369, %v368
    %v477 = vpack.c.b16 %v371, %v370
    %v478 = vpack.c.b16 %v373, %v372
    %v479 = vpack.c.b16 %v375, %v374
    %v480 = vpack.c.b16 %v377, %v376
    %v481 = vpack.c.b16 %v379, %v378
    %v482 = vpack.c.b16 %v381, %v380
    %v483 = vpack.c.b16 %v383, %v382
    %v484 = vpack.c.b16 %v385, %v384
    %v485 = vpack.c.b16 %v387, %v386
    %v486 = vpack.c.b16 %v389, %v388
    %v487 = vpack.c.b16 %v391, %v390
    %v488 = vpack.c.b16 %v393, %v392
    %v489 = vpack.c.b16 %v395, %v394
    %v490 = vpack.c.b16 %v397, %v396
    %v491 = vpack.c.b16 %v399, %v398
    %v492 = vpack.c.b16 %v401, %v400
    %v493 = vpack.c.b16 %v403, %v402
    %v494 = vpack.c.b16 %v405, %v404
    %v495 = vpack.c.b16 %v407, %v406
    %v496 = vpack.c.b16 %v409, %v408
    %v497 = vpack.c.b16 %v411, %v410
    %v498 = vpack.c.b16 %v413, %v412
    %v499 = vpack.c.b16 %v415, %v414
    %v500 = vpack.c.b16 %v417, %v416
    %v501 = vpack.c.b16 %v419, %v418
    %v502 = vpack.c.b16 %v421, %v420
    %v503 = vpack.c.b16 %v423, %v422
    %v504 = vpack.c.b16 %v425, %v424
    %v505 = vpack.c.b16 %v427, %v426
    %v506 = vpack.c.b16 %v429, %v428
    %v507 = vpack.c.b16 %v431, %v430
    %v508 = vpack.c.b16 %v433, %v432
    %v509 = vpack.c.b16 %v435, %v434
    %v510 = vpack.c.b16 %v437, %v436
    %v511 = vpack.c.b16 %v439, %v438
    %v512 = vpack.c.b16 %v441, %v440
    %v513 = vpack.c.b16 %v443, %v442
    %v514 = vpack.c.b16 %v445, %v444
    %v515 = vpack.c.b16 %v447, %v446
    %v516 = vpack.c.b16 %v449, %v448
    %v517 = vpack.c.b16 %v451, %v450
    %v518 = vpack.c.b16 %v453, %v452
    %v519 = vpack.c.b16 %v455, %v454
    %v520 = vpack.c.b16 %v457, %v456
    %v521 = vpack.c.b16 %v458, %v458
    %vm584 = vcmask 850944
    %v586 = vsel %vm584, %v76, 0
    %vm588 = vcmask 1043456
    %v590 = vsel %vm588, %v521, 0
    %592 = vmatprep.subr.bf16.mxu0 0
    %593 = vmatpush1.bf16.msra.mxu0 %v459
    %594 = vmatprep.subr.bf16.mxu0 0
    %595 = vmatpush1.bf16.msra.mxu0 %v460
    %596 = vmatprep.subr.bf16.mxu0 0
    %597 = vmatpush1.bf16.msra.mxu0 %v461
    %598 = vmatprep.subr.bf16.mxu0 0
    %599 = vmatpush1.bf16.msra.mxu0 %v462
    %600 = vmatprep.subr.bf16.mxu0 0
    %601 = vmatpush1.bf16.msra.mxu0 %v463
    %602 = vmatprep.subr.bf16.mxu0 0
    %603 = vmatpush1.bf16.msra.mxu0 %v464
    %604 = vmatprep.subr.bf16.mxu0 0
    %605 = vmatpush1.bf16.msra.mxu0 %v465
    %606 = vmatprep.subr.bf16.mxu0 0
    %607 = vmatpush1.bf16.msra.mxu0 %v466
    %608 = vmatprep.subr.bf16.mxu0 0
    %609 = vmatpush1.bf16.msra.mxu0 %v467
    %610 = vmatprep.subr.bf16.mxu0 0
    %611 = vmatpush1.bf16.msra.mxu0 %v468
    %612 = vmatprep.subr.bf16.mxu0 0
    %613 = vmatpush1.bf16.msra.mxu0 %v469
    %614 = vmatprep.subr.bf16.mxu0 0
    %615 = vmatpush1.bf16.msra.mxu0 %v470
    %616 = vmatprep.subr.bf16.mxu0 0
    %617 = vmatpush1.bf16.msra.mxu0 %v471
    %618 = vmatprep.subr.bf16.mxu0 0
    %619 = vmatpush1.bf16.msra.mxu0 %v472
    %620 = vmatprep.subr.bf16.mxu0 0
    %621 = vmatpush1.bf16.msra.mxu0 %v473
    %622 = vmatprep.subr.bf16.mxu0 0
    %623 = vmatpush1.bf16.msra.mxu0 %v474
    %624 = vmatprep.mubr.bf16.mxu0 %v70
    %625 = vmatmul.mubr.bf16.gmra.mrb[0].mxu0 %v69
    %v626 = vpop.f32.mrb[0].mxu0
    %v627 = vadd.f32 %v207, %v626
    %v628 = vpop.f32.mrb[0].mxu0
    %v629 = vpop.f32.mrb[0].mxu0
    %v630 = vpop.f32.mrb[0].mxu0
    %631 = vdwg.mxu0
    %632 = vmatprep.subr.bf16.mxu0 0
    %633 = vmatpush1.bf16.msra.mxu0 %v475
    %634 = vmatprep.subr.bf16.mxu0 0
    %635 = vmatpush1.bf16.msra.mxu0 %v476
    %636 = vmatprep.subr.bf16.mxu0 0
    %637 = vmatpush1.bf16.msra.mxu0 %v477
    %638 = vmatprep.subr.bf16.mxu0 0
    %639 = vmatpush1.bf16.msra.mxu0 %v478
    %640 = vmatprep.subr.bf16.mxu0 0
    %641 = vmatpush1.bf16.msra.mxu0 %v479
    %642 = vmatprep.subr.bf16.mxu0 0
    %643 = vmatpush1.bf16.msra.mxu0 %v480
    %644 = vmatprep.subr.bf16.mxu0 0
    %645 = vmatpush1.bf16.msra.mxu0 %v481
    %646 = vmatprep.subr.bf16.mxu0 0
    %647 = vmatpush1.bf16.msra.mxu0 %v482
    %648 = vmatprep.subr.bf16.mxu0 0
    %649 = vmatpush1.bf16.msra.mxu0 %v483
    %650 = vmatprep.subr.bf16.mxu0 0
    %651 = vmatpush1.bf16.msra.mxu0 %v484
    %652 = vmatprep.subr.bf16.mxu0 0
    %653 = vmatpush1.bf16.msra.mxu0 %v485
    %654 = vmatprep.subr.bf16.mxu0 0
    %655 = vmatpush1.bf16.msra.mxu0 %v486
    %656 = vmatprep.subr.bf16.mxu0 0
    %657 = vmatpush1.bf16.msra.mxu0 %v487
    %658 = vmatprep.subr.bf16.mxu0 0
    %659 = vmatpush1.bf16.msra.mxu0 %v488
    %660 = vmatprep.subr.bf16.mxu0 0
    %661 = vmatpush1.bf16.msra.mxu0 %v489
    %662 = vmatprep.subr.bf16.mxu0 0
    %663 = vmatpush1.bf16.msra.mxu0 %v490
    %664 = vmatprep.mubr.bf16.mxu0 %v72
    %665 = vmatmul.mubr.bf16.gmra.mrb[0].mxu0 %v71
    %v666 = vpop.f32.mrb[0].mxu0
    %v667 = vadd.f32 %v627, %v666
    %v668 = vpop.f32.mrb[0].mxu0
    %v669 = vpop.f32.mrb[0].mxu0
    %v670 = vpop.f32.mrb[0].mxu0
    %671 = vdwg.mxu0
    %672 = vmatprep.subr.bf16.mxu0 0
    %673 = vmatpush1.bf16.msra.mxu0 %v491
    %674 = vmatprep.subr.bf16.mxu0 0
    %675 = vmatpush1.bf16.msra.mxu0 %v492
    %676 = vmatprep.subr.bf16.mxu0 0
    %677 = vmatpush1.bf16.msra.mxu0 %v493
    %678 = vmatprep.subr.bf16.mxu0 0
    %679 = vmatpush1.bf16.msra.mxu0 %v494
    %680 = vmatprep.subr.bf16.mxu0 0
    %681 = vmatpush1.bf16.msra.mxu0 %v495
    %682 = vmatprep.subr.bf16.mxu0 0
    %683 = vmatpush1.bf16.msra.mxu0 %v496
    %684 = vmatprep.subr.bf16.mxu0 0
    %685 = vmatpush1.bf16.msra.mxu0 %v497
    %686 = vmatprep.subr.bf16.mxu0 0
    %687 = vmatpush1.bf16.msra.mxu0 %v498
    %688 = vmatprep.subr.bf16.mxu0 0
    %689 = vmatpush1.bf16.msra.mxu0 %v499
    %690 = vmatprep.subr.bf16.mxu0 0
    %691 = vmatpush1.bf16.msra.mxu0 %v500
    %692 = vmatprep.subr.bf16.mxu0 0
    %693 = vmatpush1.bf16.msra.mxu0 %v501
    %694 = vmatprep.subr.bf16.mxu0 0
    %695 = vmatpush1.bf16.msra.mxu0 %v502
    %696 = vmatprep.subr.bf16.mxu0 0
    %697 = vmatpush1.bf16.msra.mxu0 %v503
    %698 = vmatprep.subr.bf16.mxu0 0
    %699 = vmatpush1.bf16.msra.mxu0 %v504
    %700 = vmatprep.subr.bf16.mxu0 0
    %701 = vmatpush1.bf16.msra.mxu0 %v505
    %702 = vmatprep.subr.bf16.mxu0 0
    %703 = vmatpush1.bf16.msra.mxu0 %v506
    %704 = vmatprep.mubr.bf16.mxu0 %v74
    %705 = vmatmul.mubr.bf16.gmra.mrb[0].mxu0 %v73
    %v706 = vpop.f32.mrb[0].mxu0
    %v707 = vadd.f32 %v667, %v706
    %v708 = vpop.f32.mrb[0].mxu0
    %v709 = vpop.f32.mrb[0].mxu0
    %v710 = vpop.f32.mrb[0].mxu0
    %711 = vdwg.mxu0
    %712 = vmatprep.subr.bf16.mxu0 0
    %713 = vmatpush1.bf16.msra.mxu0 %v507
    %714 = vmatprep.subr.bf16.mxu0 0
    %715 = vmatpush1.bf16.msra.mxu0 %v508
    %716 = vmatprep.subr.bf16.mxu0 0
    %717 = vmatpush1.bf16.msra.mxu0 %v509
    %718 = vmatprep.subr.bf16.mxu0 0
    %719 = vmatpush1.bf16.msra.mxu0 %v510
    %720 = vmatprep.subr.bf16.mxu0 0
    %721 = vmatpush1.bf16.msra.mxu0 %v511
    %722 = vmatprep.subr.bf16.mxu0 0
    %723 = vmatpush1.bf16.msra.mxu0 %v512
    %724 = vmatprep.subr.bf16.mxu0 0
    %725 = vmatpush1.bf16.msra.mxu0 %v513
    %726 = vmatprep.subr.bf16.mxu0 0
    %727 = vmatpush1.bf16.msra.mxu0 %v514
    %728 = vmatprep.subr.bf16.mxu0 0
    %729 = vmatpush1.bf16.msra.mxu0 %v515
    %730 = vmatprep.subr.bf16.mxu0 0
    %731 = vmatpush1.bf16.msra.mxu0 %v516
    %732 = vmatprep.subr.bf16.mxu0 0
    %733 = vmatpush1.bf16.msra.mxu0 %v517
    %734 = vmatprep.subr.bf16.mxu0 0
    %735 = vmatpush1.bf16.msra.mxu0 %v518
    %736 = vmatprep.subr.bf16.mxu0 0
    %737 = vmatpush1.bf16.msra.mxu0 %v519
    %738 = vmatprep.subr.bf16.mxu0 0
    %739 = vmatpush1.bf16.msra.mxu0 %v520
    %740 = vmatprep.subr.bf16.mxu0 0
    %741 = vmatpush1.bf16.msra.mxu0 %v590
    %742 = vmatprep.subr.bf16.mxu0 0
    %743 = vmatpush1.bf16.msra.mxu0 0
    %744 = vmatprep.mubr.bf16.mxu0 %v586
    %745 = vmatmul.mubr.bf16.gmra.mrb[0].mxu0 %v75
    %v746 = vpop.f32.mrb[0].mxu0
    %v747 = vadd.f32 %v707, %v746
    %v748 = vpop.f32.mrb[0].mxu0
    %v749 = vpop.f32.mrb[0].mxu0
    %v750 = vpop.f32.mrb[0].mxu0
    %751 = vdwg.mxu0
    %v752 = vmax.f32 %v747, 0.0
    %v753 = vpack.c.bf16 %v752, %v752
    %v754 = vld [vmem:[#allocation7] sm:$0xf]
    %v755 = vld [vmem:[#allocation7 + $0x4] sm:$0xf]
    %v756 = vld [vmem:[#allocation7 + $0x8] sm:$0xf]
    %v757 = vld [vmem:[#allocation7 + $0xc] sm:$0xf]
    %v758 = vld [vmem:[#allocation7 + $0x10] sm:$0xf]
    %v759 = vld [vmem:[#allocation7 + $0x14] sm:$0xf]
    %v760 = vld [vmem:[#allocation7 + $0x18] sm:$0xf]
    %v761 = vld [vmem:[#allocation7 + $0x1c] sm:$0xf]
    %v762 = vld [vmem:[#allocation7 + $0x20] sm:$0xf]
    %v763 = vld [vmem:[#allocation7 + $0x24] sm:$0xf]
    %v764 = vld [vmem:[#allocation7 + $0x28] sm:$0xf]
    %v765 = vld [vmem:[#allocation7 + $0x2c] sm:$0xf]
    %v766 = vld [vmem:[#allocation7 + $0x30] sm:$0xf]
    %v767 = vld [vmem:[#allocation7 + $0x34] sm:$0xf]
    %v768 = vld [vmem:[#allocation7 + $0x38] sm:$0xf]
    %v769 = vld [vmem:[#allocation7 + $0x3c] sm:$0xf]
    %v770 = vld [vmem:[%s4] sm:$0x1]
    %v772 = vlaneseq
    %v773 = vshrl.u32 %v772, 7
    %v774 = vsub.s32 0, %v773
    %v775 = vrot.slane %v770, %v774
    %v793 = vunpack.c.l.b16 %v754
    %v794 = vunpack.c.l.b16 %v755
    %v795 = vunpack.c.l.b16 %v756
    %v796 = vunpack.c.l.b16 %v757
    %v797 = vunpack.c.l.b16 %v758
    %v798 = vunpack.c.l.b16 %v759
    %v799 = vunpack.c.l.b16 %v760
    %v800 = vunpack.c.l.b16 %v761
    %v801 = vunpack.c.l.b16 %v762
    %v802 = vunpack.c.l.b16 %v763
    %v803 = vunpack.c.l.b16 %v764
    %v804 = vunpack.c.l.b16 %v765
    %v805 = vunpack.c.l.b16 %v766
    %v806 = vunpack.c.l.b16 %v767
    %v807 = vunpack.c.l.b16 %v768
    %v808 = vunpack.c.l.b16 %v769
    %v809 = vpack.c.b16 %v794, %v793
    %v810 = vpack.c.b16 %v796, %v795
    %v811 = vpack.c.b16 %v798, %v797
    %v812 = vpack.c.b16 %v800, %v799
    %v813 = vpack.c.b16 %v802, %v801
    %v814 = vpack.c.b16 %v804, %v803
    %v815 = vpack.c.b16 %v806, %v805
    %v816 = vpack.c.b16 %v808, %v807
    %825 = vmatprep.subr.bf16.mxu0 0
    %826 = vmatpush1.bf16.msra.mxu0 %v809
    %827 = vmatprep.subr.bf16.mxu0 0
    %828 = vmatpush1.bf16.msra.mxu0 %v810
    %829 = vmatprep.subr.bf16.mxu0 0
    %830 = vmatpush1.bf16.msra.mxu0 %v811
    %831 = vmatprep.subr.bf16.mxu0 0
    %832 = vmatpush1.bf16.msra.mxu0 %v812
    %833 = vmatprep.subr.bf16.mxu0 0
    %834 = vmatpush1.bf16.msra.mxu0 %v813
    %835 = vmatprep.subr.bf16.mxu0 0
    %836 = vmatpush1.bf16.msra.mxu0 %v814
    %837 = vmatprep.subr.bf16.mxu0 0
    %838 = vmatpush1.bf16.msra.mxu0 %v815
    %839 = vmatprep.subr.bf16.mxu0 0
    %840 = vmatpush1.bf16.msra.mxu0 %v816
    %841 = vmatprep.subr.bf16.mxu0 0
    %842 = vmatpush1.bf16.msra.mxu0 0
    %843 = vmatprep.subr.bf16.mxu0 0
    %844 = vmatpush1.bf16.msra.mxu0 0
    %845 = vmatprep.subr.bf16.mxu0 0
    %846 = vmatpush1.bf16.msra.mxu0 0
    %847 = vmatprep.subr.bf16.mxu0 0
    %848 = vmatpush1.bf16.msra.mxu0 0
    %849 = vmatprep.subr.bf16.mxu0 0
    %850 = vmatpush1.bf16.msra.mxu0 0
    %851 = vmatprep.subr.bf16.mxu0 0
    %852 = vmatpush1.bf16.msra.mxu0 0
    %853 = vmatprep.subr.bf16.mxu0 0
    %854 = vmatpush1.bf16.msra.mxu0 0
    %855 = vmatprep.subr.bf16.mxu0 0
    %856 = vmatpush1.bf16.msra.mxu0 0
    %857 = vmatprep.mubr.bf16.mxu0 0
    %858 = vmatmul.mubr.bf16.gmra.mrb[0].mxu0 %v753
    %v859 = vpop.f32.mrb[0].mxu0
    %v860 = vadd.f32 %v775, %v859
    %v861 = vpop.f32.mrb[0].mxu0
    %v862 = vpop.f32.mrb[0].mxu0
    %v863 = vpop.f32.mrb[0].mxu0
    %864 = vdwg.mxu0
    %v865 = vpack.c.bf16 %v860, %v860
    %866 = vst [vmem:[#allocation8] sm:$0xf] %v865
    // Predicated region
    $region34: #{tpu_custom_call.1} parent=1 // pred_check
      _
    $region35: #{tpu_custom_call.1} parent=1 // pred_check_branch
      %868 = sbr.rel (0) target = $region37
    $region36: #{tpu_custom_call.1} parent=1 // pred_region
      %s870 = ssub.s32 64, 64
      %871 = vsyncadd [#allocation4], %s870
      %s873 = sshll.u32 [#allocation8], 4
      %s874 = int_to_ptr.vmem [resolvable:$true] %s873
      %876 = dma.vmem_to_hbm [thread:$0]  %s874, 64, %s5, [#allocation4]
    $region37: #{tpu_custom_call.1} parent=1 // pred_fallthru
      _
    // Predicated region
    $region38: #{tpu_custom_call.1} parent=1 // pred_check
      _
    $region39: #{tpu_custom_call.1} parent=1 // pred_check_branch
      %878 = sbr.rel (0) target = $region41
    $region40: #{tpu_custom_call.1} parent=1 // pred_region
      %879 = dma.done [#allocation4], 64
    $region41: #{tpu_custom_call.1} parent=1 // pred_fallthru
      _
    %880 = vsyncpa [#allocation3], 1
    %881 = vsyncpa [#allocation6], 1
    %882 = vsyncpa [#allocation4], 1

</llo_original>
